<compile_context>
chip_gen: v6e
topology: v6e:2x2x1
jax: 0.10.0
libtpu: 0.0.40
codegen_flags: <defaults>
</compile_context>

<pallas_src>
import functools

import jax
import jax.numpy as jnp
from jax.experimental import pallas as pl
from jax.experimental.pallas import tpu as pltpu


def _round_up(x, m):
    return (x + m - 1) // m * m


def _tdnn_kernel(*refs, kernel_size, dilation, pad_l, tile_l, use_skip,
                 fused, split_window):
    # Refs (split_window=False):  x (C_in, L_pad) | w | scale | shift | o
    # Refs (split_window=True):   x_lo (C_in, TL), x_hi (C_in, TL) | w | ... | o
    #   w:          (C_out, K*C_in) if fused else (K, C_out, C_in)  (compute dtype)
    #   scale/shift:(C_out, 1) f32 folded BN
    #   o:          (C_out, TL)
    if split_window:
        x_lo, x_hi, w_ref, scale_ref, shift_ref, o_ref = refs
        # Tile window + right halo assembled from two adjacent aligned blocks.
        win = jnp.concatenate([x_lo[...], x_hi[...]], axis=-1)   # (C_in, 2*TL)

        def tap(off):                      # static lane-offset slice of a value
            return win[:, off:off + tile_l]
    else:
        x_ref, w_ref, scale_ref, shift_ref, o_ref = refs

        def tap(off):                      # static lane-offset slice of the ref
            return x_ref[:, off:off + tile_l]

    if fused:
        # One wide contraction: (C_out, K*C_in) x (K*C_in, TL) on the MXU.
        rhs = jnp.concatenate([tap(k * dilation) for k in range(kernel_size)],
                              axis=0)
        acc = jnp.dot(w_ref[...], rhs, preferred_element_type=jnp.float32)
    else:
        # K MXU matmuls, accumulated in registers; single store to o_ref below.
        acc = jnp.dot(w_ref[0], tap(0), preferred_element_type=jnp.float32)
        for k in range(1, kernel_size):
            acc = acc + jnp.dot(w_ref[k], tap(k * dilation),
                                preferred_element_type=jnp.float32)

    y = acc * scale_ref[...] + shift_ref[...]        # folded BatchNorm1d (eval)
    y = jnp.maximum(y, 0.0)                          # ReLU
    if use_skip:
        # Residual sliced from the already-resident input window.
        y = y + tap(pad_l).astype(jnp.float32)
    o_ref[...] = y.astype(o_ref.dtype)


def tdnn_forward(x_ncl, weight, gamma, beta, running_mean, running_var, *,
                 kernel_size, dilation=1, eps=1e-5, use_skip=False,
                 tile_l=None, compute_dtype=jnp.bfloat16,
                 out_dtype=jnp.float32, fuse_taps=None):
    """x_ncl: (N, C_in, L) as in PyTorch.  weight: (C_out, C_in, K)."""
    N, c_in, L = x_ncl.shape
    c_out, _, K = weight.shape
    assert K == kernel_size

    pad_total = dilation * (K - 1)          # stride == 1 => SAME padding
    pad_l = pad_total // 2                  # matches PyTorch 'same' for odd K

    # ---- per-generation VMEM budget (v7x: 64 MiB/TC, v5e/v6e: 128 MiB) ----
    try:
        vmem_cap = int(pltpu.get_tpu_info().vmem_capacity_bytes)
    except Exception:
        vmem_cap = 64 * 1024 * 1024         # conservative default
    vmem_budget = (vmem_cap * 7) // 8       # leave compiler-scratch headroom

    if tile_l is None:
        tile_l = 1024 if vmem_cap >= 96 * 1024 * 1024 else 512
    tile_l = max(128, (int(tile_l) // 128) * 128)

    # ---- L tiling: one full-row tile when it fits, 128-aligned tiles when L
    #      is long (and when N == 1, so both v7x TensorCores get work) ----
    if L > tile_l:
        TL = tile_l
    elif N == 1 and L >= 256:
        TL = _round_up(-(-L // 2), 128)
    else:
        TL = L
    n_l = -(-L // TL)
    split = n_l > 1
    if split and pad_total > TL:            # halo wider than a tile: one tile
        TL, n_l, split = L, 1, False
    L_out = n_l * TL

    if fuse_taps is None:
        fuse_taps = c_in < 256              # narrow channels: widen contraction
    fused = bool(fuse_taps) and K > 1
    do_skip = bool(use_skip and c_in == c_out)   # module drops skip otherwise

    # ---- single pad(+cast) pass; layout stays NCL, no transposes ----
    L_pad = (n_l + 1) * TL if split else L + pad_total
    x_pad = jnp.pad(x_ncl.astype(compute_dtype),
                    ((0, 0), (0, 0), (pad_l, L_pad - pad_l - L)))

    if fused:
        # (C_out, K*C_in), k-major rows to match the in-kernel tap concat.
        w_arr = jnp.transpose(weight, (0, 2, 1)).reshape(c_out, K * c_in)
        w_arr = w_arr.astype(compute_dtype)
    else:
        w_arr = jnp.transpose(weight, (2, 0, 1)).astype(compute_dtype)  # (K,Co,Ci)
    w_shape = tuple(w_arr.shape)

    scale_v = (gamma / jnp.sqrt(running_var + eps)).astype(jnp.float32)
    shift_v = (beta - running_mean * scale_v).astype(jnp.float32)
    scale = scale_v.reshape(c_out, 1)
    shift = shift_v.reshape(c_out, 1)

    kernel = functools.partial(
        _tdnn_kernel, kernel_size=K, dilation=dilation, pad_l=pad_l,
        tile_l=TL, use_skip=do_skip, fused=fused, split_window=split)

    cd_b = jnp.dtype(compute_dtype).itemsize
    out_b = jnp.dtype(out_dtype).itemsize
    cost = pl.CostEstimate(
        flops=int(2 * N * L_out * K * c_in * c_out),
        transcendentals=0,
        bytes_accessed=int(x_pad.size * cd_b * (2 if split else 1)
                           + w_arr.size * cd_b + N * c_out * L_out * out_b),
    )

    def build(single_buffer):
        # Invariant operands (weights, BN scale/shift) single-buffered.
        pm = dict(pipeline_mode=pl.Buffered(1)) if single_buffer else {}
        if split:
            grid = (N, n_l)
            x_specs = [
                pl.BlockSpec((None, c_in, TL), lambda n, l: (n, 0, l)),
                pl.BlockSpec((None, c_in, TL), lambda n, l: (n, 0, l + 1)),
            ]
            w_spec = pl.BlockSpec(w_shape, lambda n, l: (0,) * len(w_shape), **pm)
            ss_spec = pl.BlockSpec((c_out, 1), lambda n, l: (0, 0), **pm)
            out_spec = pl.BlockSpec((None, c_out, TL), lambda n, l: (n, 0, l))
            dims = ("parallel", "parallel")
            in_bytes = 4 * c_in * TL * cd_b           # 2 specs, double-buffered
            tmp_bytes = 2 * c_in * TL * cd_b          # concatenated window
        else:
            grid = (N,)
            x_specs = [pl.BlockSpec((None, c_in, L_pad), lambda n: (n, 0, 0))]
            w_spec = pl.BlockSpec(w_shape, lambda n: (0,) * len(w_shape), **pm)
            ss_spec = pl.BlockSpec((c_out, 1), lambda n: (0, 0), **pm)
            out_spec = pl.BlockSpec((None, c_out, L_out), lambda n: (n, 0, 0))
            dims = ("parallel",)
            in_bytes = 2 * c_in * L_pad * cd_b        # full row, double-buffered
            tmp_bytes = 0
        w_bytes = (1 if single_buffer else 2) * int(w_arr.size) * cd_b
        tmp_bytes += (K * c_in * TL * cd_b if fused else 0) + c_out * TL * 4
        need = (in_bytes + w_bytes + 2 * c_out * TL * out_b
                + 4 * c_out * 4 + tmp_bytes)
        vmem_limit = int(min(max(2 * need, 32 * 1024 * 1024), vmem_budget))

        return pl.pallas_call(
            kernel,
            out_shape=jax.ShapeDtypeStruct((N, c_out, L_out), out_dtype),
            grid_spec=pltpu.PrefetchScalarGridSpec(
                num_scalar_prefetch=0, grid=grid,
                in_specs=x_specs + [w_spec, ss_spec, ss_spec],
                out_specs=out_spec),
            compiler_params=pltpu.CompilerParams(
                dimension_semantics=dims, vmem_limit_bytes=vmem_limit),
            cost_estimate=cost,
        )

    operands = ([x_pad, x_pad] if split else [x_pad]) + [w_arr, scale, shift]
    try:
        out = build(True)(*operands)
    except Exception:
        # Fallback for jax versions without per-BlockSpec pipeline_mode.
        out = build(False)(*operands)

    return out if L_out == L else out[:, :, :L]


def _reference(x_ncl, weight, gamma, beta, running_mean, running_var, *,
               kernel_size, dilation, eps=1e-5, use_skip=False,
               cast_dtype=None):
    """Pure-JAX mirror of the PyTorch forward (eval-mode BN).  If cast_dtype is
    given, x and w are rounded to it first (mirrors the kernel's bf16 operands)."""
    N, c_in, L = x_ncl.shape
    c_out = weight.shape[0]
    x = jnp.transpose(x_ncl, (0, 2, 1))
    w = jnp.transpose(weight, (2, 1, 0))
    if cast_dtype is not None:
        x = x.astype(cast_dtype)
        w = w.astype(cast_dtype)
    x = x.astype(jnp.float32)
    w = w.astype(jnp.float32)
    pad_total = dilation * (kernel_size - 1)
    pad_l = pad_total // 2
    x_pad = jnp.pad(x, ((0, 0), (pad_l, pad_total - pad_l), (0, 0)))
    y = jnp.zeros((N, L, c_out), jnp.float32)
    for k in range(kernel_size):
        y = y + jnp.einsum("nlc,cd->nld",
                           x_pad[:, k * dilation:k * dilation + L, :], w[k],
                           preferred_element_type=jnp.float32)
    scale = gamma / jnp.sqrt(running_var + eps)
    shift = beta - running_mean * scale
    y = y * scale[None, None, :] + shift[None, None, :]
    y = jnp.maximum(y, 0.0)
    if use_skip and c_in == c_out:
        y = y + x
    return jnp.transpose(y, (0, 2, 1))


if __name__ == "__main__":
    key = jax.random.PRNGKey(0)

    def make_case(k, N, c_in, c_out, L, K):
        k_x, k_w, k_m, k_v = jax.random.split(k, 4)
        x = jax.random.normal(k_x, (N, c_in, L), dtype=jnp.float32)
        weight = jax.random.normal(k_w, (c_out, c_in, K), dtype=jnp.float32) * 0.1
        gamma = jnp.full((c_out,), 1.1, jnp.float32)
        beta = jnp.full((c_out,), 0.05, jnp.float32)
        running_mean = jax.random.normal(k_m, (c_out,), dtype=jnp.float32) * 0.05
        running_var = jnp.abs(jax.random.normal(k_v, (c_out,), jnp.float32)) * 0.1 + 0.9
        return x, weight, gamma, beta, running_mean, running_var

    k1, k2, k3 = jax.random.split(key, 3)

    # Case 1: single-tile path (grid over N only), fused taps, residual skip.
    args1 = make_case(k1, N=2, c_in=8, c_out=8, L=16, K=3)
    out1 = jax.block_until_ready(
        tdnn_forward(*args1, kernel_size=3, dilation=2, use_skip=True))
    ref1_bf = _reference(*args1, kernel_size=3, dilation=2, use_skip=True,
                         cast_dtype=jnp.bfloat16)
    ref1_f32 = _reference(*args1, kernel_size=3, dilation=2, use_skip=True)
    assert out1.shape == (2, 8, 16)
    assert jnp.allclose(out1, ref1_bf, atol=1e-3, rtol=1e-3), "mismatch (bf16 ref)"
    assert jnp.allclose(out1, ref1_f32, atol=5e-2, rtol=5e-2), "mismatch (f32 ref)"

    # Case 2: tiled-L path (128-wide lane-dense output tiles, halo taken from
    # the adjacent aligned block), no skip.
    args2 = make_case(k2, N=2, c_in=8, c_out=16, L=300, K=3)
    out2 = jax.block_until_ready(
        tdnn_forward(*args2, kernel_size=3, dilation=2, use_skip=False,
                     tile_l=128))
    ref2_bf = _reference(*args2, kernel_size=3, dilation=2, use_skip=False,
                         cast_dtype=jnp.bfloat16)
    assert out2.shape == (2, 16, 300)
    assert jnp.allclose(out2, ref2_bf, atol=1e-3, rtol=1e-3), "mismatch (tiled path)"

    # Case 3: per-tap register-accumulation path (fuse_taps=False), K=5.
    args3 = make_case(k3, N=1, c_in=8, c_out=8, L=32, K=5)
    out3 = jax.block_until_ready(
        tdnn_forward(*args3, kernel_size=5, dilation=1, use_skip=True,
                     fuse_taps=False))
    ref3_bf = _reference(*args3, kernel_size=5, dilation=1, use_skip=True,
                         cast_dtype=jnp.bfloat16)
    assert out3.shape == (1, 8, 32)
    assert jnp.allclose(out3, ref3_bf, atol=1e-3, rtol=1e-3), "mismatch (per-tap path)"

    print("KERNEL_OK")
</pallas_src>

<mosaic_0001>
module attributes {stable_mosaic.version = 11 : i64} {
  func.func @_tdnn_kernel(%arg0: i32, %arg1: memref<1x8x20xbf16, #tpu.memory_space<vmem>>, %arg2: memref<8x24xbf16, #tpu.memory_space<vmem>>, %arg3: memref<8x1xf32, #tpu.memory_space<vmem>>, %arg4: memref<8x1xf32, #tpu.memory_space<vmem>>, %arg5: memref<1x8x16xf32, #tpu.memory_space<vmem>>) attributes {dimension_semantics = [#tpu.dimension_semantics<parallel>], iteration_bounds = array<i64: 2>, scalar_prefetch = 0 : i64, scratch_operands = 0 : i64, tpu.core_type = #tpu.core_type<tc>, window_params = [{transform_indices = @transform_0, window_bounds = array<i64: 1, 8, 20>}, {pipeline_mode = #tpu.pipeline_mode<synchronous>, transform_indices = @transform_1, window_bounds = array<i64: 8, 24>}, {pipeline_mode = #tpu.pipeline_mode<synchronous>, transform_indices = @transform_2, window_bounds = array<i64: 8, 1>}, {pipeline_mode = #tpu.pipeline_mode<synchronous>, transform_indices = @transform_3, window_bounds = array<i64: 8, 1>}, {transform_indices = @transform_4, window_bounds = array<i64: 1, 8, 16>}]} {
    %c0 = arith.constant 0 : index
    %c0_0 = arith.constant 0 : index
    %c0_1 = arith.constant 0 : index
    %0 = vector.load %arg1[%c0, %c0_0, %c0_1] : memref<1x8x20xbf16, #tpu.memory_space<vmem>>, vector<1x8x16xbf16>
    %1 = vector.shape_cast %0 : vector<1x8x16xbf16> to vector<8x16xbf16>
    %c0_2 = arith.constant 0 : index
    %c0_3 = arith.constant 0 : index
    %c2 = arith.constant 2 : index
    %2 = vector.load %arg1[%c0_2, %c0_3, %c2] : memref<1x8x20xbf16, #tpu.memory_space<vmem>>, vector<1x8x16xbf16>
    %3 = vector.shape_cast %2 : vector<1x8x16xbf16> to vector<8x16xbf16>
    %c0_4 = arith.constant 0 : index
    %c0_5 = arith.constant 0 : index
    %c4 = arith.constant 4 : index
    %4 = vector.load %arg1[%c0_4, %c0_5, %c4] : memref<1x8x20xbf16, #tpu.memory_space<vmem>>, vector<1x8x16xbf16>
    %5 = vector.shape_cast %4 : vector<1x8x16xbf16> to vector<8x16xbf16>
    %6 = tpu.concatenate %1, %3, %5 in 0 : vector<8x16xbf16>, vector<8x16xbf16>, vector<8x16xbf16> -> vector<24x16xbf16>
    %c0_6 = arith.constant 0 : index
    %c0_7 = arith.constant 0 : index
    %7 = vector.load %arg2[%c0_6, %c0_7] : memref<8x24xbf16, #tpu.memory_space<vmem>>, vector<8x24xbf16>
    %cst = arith.constant dense<0.000000e+00> : vector<8x16xf32>
    %8 = tpu.matmul %7, %6, %cst {dimension_numbers = #tpu.dot_dimension_numbers<[1], [0], [0], [1], [0, 0, 1, 1], [], []>} : vector<8x24xbf16>, vector<24x16xbf16>, vector<8x16xf32> -> vector<8x16xf32>
    %c0_8 = arith.constant 0 : index
    %c0_9 = arith.constant 0 : index
    %9 = vector.load %arg3[%c0_8, %c0_9] : memref<8x1xf32, #tpu.memory_space<vmem>>, vector<8x1xf32>
    %10 = vector.broadcast %9 : vector<8x1xf32> to vector<8x16xf32>
    %11 = arith.mulf %8, %10 : vector<8x16xf32>
    %c0_10 = arith.constant 0 : index
    %c0_11 = arith.constant 0 : index
    %12 = vector.load %arg4[%c0_10, %c0_11] : memref<8x1xf32, #tpu.memory_space<vmem>>, vector<8x1xf32>
    %13 = vector.broadcast %12 : vector<8x1xf32> to vector<8x16xf32>
    %14 = arith.addf %11, %13 : vector<8x16xf32>
    %cst_12 = arith.constant 0.000000e+00 : f32
    %15 = vector.broadcast %cst_12 : f32 to vector<8x16xf32>
    %16 = arith.maximumf %14, %15 : vector<8x16xf32>
    %c0_13 = arith.constant 0 : index
    %c0_14 = arith.constant 0 : index
    %c2_15 = arith.constant 2 : index
    %17 = vector.load %arg1[%c0_13, %c0_14, %c2_15] : memref<1x8x20xbf16, #tpu.memory_space<vmem>>, vector<1x8x16xbf16>
    %18 = vector.shape_cast %17 : vector<1x8x16xbf16> to vector<8x16xbf16>
    %19 = arith.extf %18 : vector<8x16xbf16> to vector<8x16xf32>
    %20 = arith.addf %16, %19 : vector<8x16xf32>
    %c0_16 = arith.constant 0 : index
    %c0_17 = arith.constant 0 : index
    %c0_18 = arith.constant 0 : index
    %21 = vector.load %arg5[%c0_16, %c0_17, %c0_18] : memref<1x8x16xf32, #tpu.memory_space<vmem>>, vector<1x8x16xf32>
    %22 = vector.shape_cast %21 : vector<1x8x16xf32> to vector<8x16xf32>
    %23 = vector.shape_cast %20 : vector<8x16xf32> to vector<1x8x16xf32>
    tpu.vector_store %arg5[%c0_16, %c0_17, %c0_18], %23 {strides = array<i32>} : memref<1x8x16xf32, #tpu.memory_space<vmem>>, vector<1x8x16xf32>,
    return
  }
  func.func @transform_0(%arg0: i32) -> (i32, i32, i32) {
    %c0_i32 = arith.constant 0 : i32
    %c0_i32_0 = arith.constant 0 : i32
    %c0_i32_1 = arith.constant 0 : i32
    return %arg0, %c0_i32, %c0_i32_0 : i32, i32, i32
  }
  func.func @transform_1(%arg0: i32) -> (i32, i32) {
    %c0_i32 = arith.constant 0 : i32
    %c0_i32_0 = arith.constant 0 : i32
    %c0_i32_1 = arith.constant 0 : i32
    return %c0_i32, %c0_i32_0 : i32, i32
  }
  func.func @transform_2(%arg0: i32) -> (i32, i32) {
    %c0_i32 = arith.constant 0 : i32
    %c0_i32_0 = arith.constant 0 : i32
    %c0_i32_1 = arith.constant 0 : i32
    return %c0_i32, %c0_i32_0 : i32, i32
  }
  func.func @transform_3(%arg0: i32) -> (i32, i32) {
    %c0_i32 = arith.constant 0 : i32
    %c0_i32_0 = arith.constant 0 : i32
    %c0_i32_1 = arith.constant 0 : i32
    return %c0_i32, %c0_i32_0 : i32, i32
  }
  func.func @transform_4(%arg0: i32) -> (i32, i32, i32) {
    %c0_i32 = arith.constant 0 : i32
    %c0_i32_0 = arith.constant 0 : i32
    %c0_i32_1 = arith.constant 0 : i32
    return %arg0, %c0_i32, %c0_i32_0 : i32, i32, i32
  }
}

module attributes {stable_mosaic.version = 11 : i64} {
  func.func @_tdnn_kernel(%arg0: i32, %arg1: memref<1x8x20xbf16, #tpu.memory_space<vmem>>, %arg2: memref<8x24xbf16, #tpu.memory_space<vmem>>, %arg3: memref<8x1xf32, #tpu.memory_space<vmem>>, %arg4: memref<8x1xf32, #tpu.memory_space<vmem>>, %arg5: memref<1x8x16xf32, #tpu.memory_space<vmem>>) attributes {dimension_semantics = [#tpu.dimension_semantics<parallel>], iteration_bounds = array<i64: 2>, scalar_prefetch = 0 : i64, scratch_operands = 0 : i64, tpu.core_type = #tpu.core_type<tc>, window_params = [{transform_indices = @transform_0, window_bounds = array<i64: 1, 8, 20>}, {pipeline_mode = #tpu.pipeline_mode<synchronous>, transform_indices = @transform_1, window_bounds = array<i64: 8, 24>}, {pipeline_mode = #tpu.pipeline_mode<synchronous>, transform_indices = @transform_2, window_bounds = array<i64: 8, 1>}, {pipeline_mode = #tpu.pipeline_mode<synchronous>, transform_indices = @transform_3, window_bounds = array<i64: 8, 1>}, {transform_indices = @transform_4, window_bounds = array<i64: 1, 8, 16>}]} {
    %c0 = arith.constant 0 : index
    %c0_0 = arith.constant 0 : index
    %c0_1 = arith.constant 0 : index
    %0 = vector.load %arg1[%c0, %c0_0, %c0_1] : memref<1x8x20xbf16, #tpu.memory_space<vmem>>, vector<1x8x16xbf16>
    %1 = vector.shape_cast %0 : vector<1x8x16xbf16> to vector<8x16xbf16>
    %c0_2 = arith.constant 0 : index
    %c0_3 = arith.constant 0 : index
    %c2 = arith.constant 2 : index
    %2 = vector.load %arg1[%c0_2, %c0_3, %c2] : memref<1x8x20xbf16, #tpu.memory_space<vmem>>, vector<1x8x16xbf16>
    %3 = vector.shape_cast %2 : vector<1x8x16xbf16> to vector<8x16xbf16>
    %c0_4 = arith.constant 0 : index
    %c0_5 = arith.constant 0 : index
    %c4 = arith.constant 4 : index
    %4 = vector.load %arg1[%c0_4, %c0_5, %c4] : memref<1x8x20xbf16, #tpu.memory_space<vmem>>, vector<1x8x16xbf16>
    %5 = vector.shape_cast %4 : vector<1x8x16xbf16> to vector<8x16xbf16>
    %6 = tpu.concatenate %1, %3, %5 in 0 : vector<8x16xbf16>, vector<8x16xbf16>, vector<8x16xbf16> -> vector<24x16xbf16>
    %c0_6 = arith.constant 0 : index
    %c0_7 = arith.constant 0 : index
    %7 = vector.load %arg2[%c0_6, %c0_7] : memref<8x24xbf16, #tpu.memory_space<vmem>>, vector<8x24xbf16>
    %cst = arith.constant dense<0.000000e+00> : vector<8x16xf32>
    %8 = tpu.matmul %7, %6, %cst {dimension_numbers = #tpu.dot_dimension_numbers<[1], [0], [0], [1], [0, 0, 1, 1], [], []>} : vector<8x24xbf16>, vector<24x16xbf16>, vector<8x16xf32> -> vector<8x16xf32>
    %c0_8 = arith.constant 0 : index
    %c0_9 = arith.constant 0 : index
    %9 = vector.load %arg3[%c0_8, %c0_9] : memref<8x1xf32, #tpu.memory_space<vmem>>, vector<8x1xf32>
    %10 = vector.broadcast %9 : vector<8x1xf32> to vector<8x16xf32>
    %11 = arith.mulf %8, %10 : vector<8x16xf32>
    %c0_10 = arith.constant 0 : index
    %c0_11 = arith.constant 0 : index
    %12 = vector.load %arg4[%c0_10, %c0_11] : memref<8x1xf32, #tpu.memory_space<vmem>>, vector<8x1xf32>
    %13 = vector.broadcast %12 : vector<8x1xf32> to vector<8x16xf32>
    %14 = arith.addf %11, %13 : vector<8x16xf32>
    %cst_12 = arith.constant 0.000000e+00 : f32
    %15 = vector.broadcast %cst_12 : f32 to vector<8x16xf32>
    %16 = arith.maximumf %14, %15 : vector<8x16xf32>
    %c0_13 = arith.constant 0 : index
    %c0_14 = arith.constant 0 : index
    %c2_15 = arith.constant 2 : index
    %17 = vector.load %arg1[%c0_13, %c0_14, %c2_15] : memref<1x8x20xbf16, #tpu.memory_space<vmem>>, vector<1x8x16xbf16>
    %18 = vector.shape_cast %17 : vector<1x8x16xbf16> to vector<8x16xbf16>
    %19 = arith.extf %18 : vector<8x16xbf16> to vector<8x16xf32>
    %20 = arith.addf %16, %19 : vector<8x16xf32>
    %c0_16 = arith.constant 0 : index
    %c0_17 = arith.constant 0 : index
    %c0_18 = arith.constant 0 : index
    %21 = vector.load %arg5[%c0_16, %c0_17, %c0_18] : memref<1x8x16xf32, #tpu.memory_space<vmem>>, vector<1x8x16xf32>
    %22 = vector.shape_cast %21 : vector<1x8x16xf32> to vector<8x16xf32>
    %23 = vector.shape_cast %20 : vector<8x16xf32> to vector<1x8x16xf32>
    tpu.vector_store %arg5[%c0_16, %c0_17, %c0_18], %23 {strides = array<i32>} : memref<1x8x16xf32, #tpu.memory_space<vmem>>, vector<1x8x16xf32>,
    return
  }
  func.func @transform_0(%arg0: i32) -> (i32, i32, i32) {
    %c0_i32 = arith.constant 0 : i32
    %c0_i32_0 = arith.constant 0 : i32
    %c0_i32_1 = arith.constant 0 : i32
    return %arg0, %c0_i32, %c0_i32_0 : i32, i32, i32
  }
  func.func @transform_1(%arg0: i32) -> (i32, i32) {
    %c0_i32 = arith.constant 0 : i32
    %c0_i32_0 = arith.constant 0 : i32
    %c0_i32_1 = arith.constant 0 : i32
    return %c0_i32, %c0_i32_0 : i32, i32
  }
  func.func @transform_2(%arg0: i32) -> (i32, i32) {
    %c0_i32 = arith.constant 0 : i32
    %c0_i32_0 = arith.constant 0 : i32
    %c0_i32_1 = arith.constant 0 : i32
    return %c0_i32, %c0_i32_0 : i32, i32
  }
  func.func @transform_3(%arg0: i32) -> (i32, i32) {
    %c0_i32 = arith.constant 0 : i32
    %c0_i32_0 = arith.constant 0 : i32
    %c0_i32_1 = arith.constant 0 : i32
    return %c0_i32, %c0_i32_0 : i32, i32
  }
  func.func @transform_4(%arg0: i32) -> (i32, i32, i32) {
    %c0_i32 = arith.constant 0 : i32
    %c0_i32_0 = arith.constant 0 : i32
    %c0_i32_1 = arith.constant 0 : i32
    return %arg0, %c0_i32, %c0_i32_0 : i32, i32, i32
  }
}

</mosaic_0001>

<llo_original>
// kernel: tpu_custom_call.1
$region0: #{tpu_custom_call.1}
  #allocation0 [shape = 'u32[]', space=smem, size = 0x4, offset = 0x4, fixed_abs, tag = 'smem constant byte address 0x4 - core index']
  #allocation1 [shape = 'u32[144,128]{1,0:T(1,128)}', space=vmem, size = 0x12000, scoped, tag = 'internal scratch']
  %s0 = inlined_call_operand.vmem [shape: bf16[2,8,20], index: 0, kind: input, shape index: {}]
  %s1 = inlined_call_operand.vmem [shape: bf16[8,24], index: 1, kind: input, shape index: {}]
  %s2 = inlined_call_operand.vmem [shape: f32[8,1], index: 2, kind: input, shape index: {}]
  %s3 = inlined_call_operand.vmem [shape: f32[8,1], index: 3, kind: input, shape index: {}]
  %s4 = inlined_call_operand.hbm [shape: f32[2,8,16], index: 4, kind: output, shape index: {}]
  %s5 = sld [smem:[#allocation0]]
  $region49: #{tpu_custom_call.1} parent=0
    _
  %s7 = ssub.s32 1, %s5
  %s8 = scalar_select 0, %s7, %s5
  $region1: #{tpu_custom_call.1} parent=0
    #allocation2 [shape = 'u8[8192]{0}', space=vmem, size = 0x2000, scoped, tag = 'output window, operand 0']
    #allocation3 [shape = 's32[2]{0}', space=sflag, size = 0x8, scoped, tag = 'scoped memory for tpu_custom_call.1']
    %9 = vsyncpa [#allocation3], 0
    %s10 = scalar_lea.sflag [#allocation3], 1
    %11 = vsyncpa %s10, 0
    loop: start=0, step=1, limit=4
    $region2: #{tpu_custom_call.1} parent=1 // loop_pre_header
      _
    $region3: #{tpu_custom_call.1} parent=1 // loop_header
      %s13 = sphi 0, %s17
      %p14 = scmp.ge.s32.totalorder %s13, 4
      %s23 = sphi 0, %s25
      %s26 = sphi 0, %s23
      %s27 = sphi 0, %s26
      %s43 = sphi 0, %s27
      %s47 = sphi 0, %s47
      %s49 = sphi 0, %s47
      %s50 = sphi 0, %s49
      %s64 = sphi 0, %s50
      %s68 = sphi 0, %s68
      %s70 = sphi 0, %s68
      %s71 = sphi 0, %s70
      %s85 = sphi 0, %s71
      %s89 = sphi 0, %s89
      %s91 = sphi 0, %s89
      %s92 = sphi 0, %s91
      %s106 = sphi 0, %s92
      %s112 = sphi 0, %s114
      %s115 = sphi 0, %s112
      %s116 = sphi 0, %s115
      %s132 = sphi 0, %s116
    $region4: #{tpu_custom_call.1} parent=1 // loop_header_branch
      %16 = sbr.rel (%p14) target = $region8
    $region5: #{tpu_custom_call.1} parent=1 // loop_body
      %s18 = ssub.s32 %s13, 1
      %s19 = ssub.s32 %s13, 2
      %s20 = sadd.s32 %s13, 1
      %s21 = ssub.s32 %s13, %s20
      %p22 = scmp.eq.s32.totalorder %s21, 0
      %s24 = sadd.s32 %s23, 1
      %s25 = scalar_select %p22, %s23, %s24
      %p28 = pneg %p22
      %p29 = scmp.eq.s32.totalorder %s13, 1
      %p30 = por %p28, %p29
      %p31 = scmp.ne.s32.totalorder %s23, %s26
      %p32 = scmp.eq.s32.totalorder %s13, 0
      %p33 = por %p31, %p32
      %p34 = scmp.ne.s32.totalorder %s23, %s26
      %p35 = scmp.eq.s32.totalorder %s18, 1
      %p36 = por %p34, %p35
      %p37 = scmp.ne.s32.totalorder %s26, %s27
      %p38 = scmp.eq.s32.totalorder %s18, 0
      %p39 = por %p37, %p38
      %p40 = scmp.ne.s32.totalorder %s26, %s27
      %p41 = scmp.eq.s32.totalorder %s19, 1
      %p42 = por %p40, %p41
      %p44 = scmp.ne.s32.totalorder %s27, %s43
      %p45 = scmp.eq.s32.totalorder %s19, 0
      %p46 = por %p44, %p45
      %s48 = sadd.s32 %s47, 1
      %p51 = scmp.eq.s32.totalorder %s13, 1
      %p52 = scmp.ne.s32.totalorder %s47, %s49
      %p53 = scmp.eq.s32.totalorder %s13, 0
      %p54 = por %p52, %p53
      %p55 = scmp.ne.s32.totalorder %s47, %s49
      %p56 = scmp.eq.s32.totalorder %s18, 1
      %p57 = por %p55, %p56
      %p58 = scmp.ne.s32.totalorder %s49, %s50
      %p59 = scmp.eq.s32.totalorder %s18, 0
      %p60 = por %p58, %p59
      %p61 = scmp.ne.s32.totalorder %s49, %s50
      %p62 = scmp.eq.s32.totalorder %s19, 1
      %p63 = por %p61, %p62
      %p65 = scmp.ne.s32.totalorder %s50, %s64
      %p66 = scmp.eq.s32.totalorder %s19, 0
      %p67 = por %p65, %p66
      %s69 = sadd.s32 %s68, 1
      %p72 = scmp.eq.s32.totalorder %s13, 1
      %p73 = scmp.ne.s32.totalorder %s68, %s70
      %p74 = scmp.eq.s32.totalorder %s13, 0
      %p75 = por %p73, %p74
      %p76 = scmp.ne.s32.totalorder %s68, %s70
      %p77 = scmp.eq.s32.totalorder %s18, 1
      %p78 = por %p76, %p77
      %p79 = scmp.ne.s32.totalorder %s70, %s71
      %p80 = scmp.eq.s32.totalorder %s18, 0
      %p81 = por %p79, %p80
      %p82 = scmp.ne.s32.totalorder %s70, %s71
      %p83 = scmp.eq.s32.totalorder %s19, 1
      %p84 = por %p82, %p83
      %p86 = scmp.ne.s32.totalorder %s71, %s85
      %p87 = scmp.eq.s32.totalorder %s19, 0
      %p88 = por %p86, %p87
      %s90 = sadd.s32 %s89, 1
      %p93 = scmp.eq.s32.totalorder %s13, 1
      %p94 = scmp.ne.s32.totalorder %s89, %s91
      %p95 = scmp.eq.s32.totalorder %s13, 0
      %p96 = por %p94, %p95
      %p97 = scmp.ne.s32.totalorder %s89, %s91
      %p98 = scmp.eq.s32.totalorder %s18, 1
      %p99 = por %p97, %p98
      %p100 = scmp.ne.s32.totalorder %s91, %s92
      %p101 = scmp.eq.s32.totalorder %s18, 0
      %p102 = por %p100, %p101
      %p103 = scmp.ne.s32.totalorder %s91, %s92
      %p104 = scmp.eq.s32.totalorder %s19, 1
      %p105 = por %p103, %p104
      %p107 = scmp.ne.s32.totalorder %s92, %s106
      %p108 = scmp.eq.s32.totalorder %s19, 0
      %p109 = por %p107, %p108
      %s110 = ssub.s32 %s13, %s20
      %p111 = scmp.eq.s32.totalorder %s110, 0
      %s113 = sadd.s32 %s112, 1
      %s114 = scalar_select %p111, %s112, %s113
      %p117 = pneg %p111
      %p118 = scmp.eq.s32.totalorder %s13, 1
      %p119 = por %p117, %p118
      %p120 = scmp.ne.s32.totalorder %s112, %s115
      %p121 = scmp.eq.s32.totalorder %s13, 0
      %p122 = por %p120, %p121
      %p123 = scmp.ne.s32.totalorder %s112, %s115
      %p124 = scmp.eq.s32.totalorder %s18, 1
      %p125 = por %p123, %p124
      %p126 = scmp.ne.s32.totalorder %s115, %s116
      %p127 = scmp.eq.s32.totalorder %s18, 0
      %p128 = por %p126, %p127
      %p129 = scmp.ne.s32.totalorder %s115, %s116
      %p130 = scmp.eq.s32.totalorder %s19, 1
      %p131 = por %p129, %p130
      %p133 = scmp.ne.s32.totalorder %s116, %s132
      %p134 = scmp.eq.s32.totalorder %s19, 0
      %p135 = por %p133, %p134
      %p136 = scmp.le.s32.totalorder 1, %s13
      %p137 = scmp.lt.s32.totalorder %s13, 3
      %p138 = pnand %p136, %p137
      %p139 = pneg %p138
      // Predicated region
      $region9: #{tpu_custom_call.1} parent=5 // pred_check
        _
      $region10: #{tpu_custom_call.1} parent=5 // pred_check_branch
        %141 = sbr.rel (%p138) target = $region12
      $region11: #{tpu_custom_call.1} parent=5 // pred_region
        %s142 = ssub.s32 %s13, 1
        // Predicated region
        $region13: #{tpu_custom_call.1} parent=11 // pred_check
          %p143 = pneg %p60
        $region14: #{tpu_custom_call.1} parent=11 // pred_check_branch
          %145 = sbr.rel (%p143) target = $region16
        $region15: #{tpu_custom_call.1} parent=11 // pred_region
          _
        $region16: #{tpu_custom_call.1} parent=11 // pred_fallthru
          _
        // Predicated region
        $region17: #{tpu_custom_call.1} parent=11 // pred_check
          %p146 = pneg %p81
        $region18: #{tpu_custom_call.1} parent=11 // pred_check_branch
          %148 = sbr.rel (%p146) target = $region20
        $region19: #{tpu_custom_call.1} parent=11 // pred_region
          _
        $region20: #{tpu_custom_call.1} parent=11 // pred_fallthru
          _
        // Predicated region
        $region21: #{tpu_custom_call.1} parent=11 // pred_check
          %p149 = pneg %p102
        $region22: #{tpu_custom_call.1} parent=11 // pred_check_branch
          %151 = sbr.rel (%p149) target = $region24
        $region23: #{tpu_custom_call.1} parent=11 // pred_region
          _
        $region24: #{tpu_custom_call.1} parent=11 // pred_fallthru
          _
      $region12: #{tpu_custom_call.1} parent=5 // pred_fallthru
        _
      %p152 = scmp.lt.s32.totalorder %s13, 2
      // Predicated region
      $region25: #{tpu_custom_call.1} parent=5 // pred_check
        %p153 = pneg %p152
      $region26: #{tpu_custom_call.1} parent=5 // pred_check_branch
        %155 = sbr.rel (%p153) target = $region28
      $region27: #{tpu_custom_call.1} parent=5 // pred_region
        // Predicated region
        $region29: #{tpu_custom_call.1} parent=27 // pred_check
          %p156 = pneg %p33
        $region30: #{tpu_custom_call.1} parent=27 // pred_check_branch
          %158 = sbr.rel (%p156) target = $region32
        $region31: #{tpu_custom_call.1} parent=27 // pred_region
          %p159 = scmp.lt.s32.totalorder %s13, 1
          %s160 = scalar_select %p159, %s13, 1
          %s161 = smul.addr %s160, 4
          %s162 = scalar_lea.vmem %s0, %s161
        $region32: #{tpu_custom_call.1} parent=27 // pred_fallthru
          _
      $region28: #{tpu_custom_call.1} parent=5 // pred_fallthru
        _
      %p163 = scmp.le.s32.totalorder 1, %s13
      %p164 = scmp.lt.s32.totalorder %s13, 3
      %p165 = pnand %p163, %p164
      %p166 = pneg %p165
      // Predicated region
      $region33: #{tpu_custom_call.1} parent=5 // pred_check
        _
      $region34: #{tpu_custom_call.1} parent=5 // pred_check_branch
        %168 = sbr.rel (%p165) target = $region36
      $region35: #{tpu_custom_call.1} parent=5 // pred_region
        %s169 = ssub.s32 %s13, 1
        %p170 = scmp.lt.s32.totalorder %s18, 1
        %s171 = scalar_select %p170, %s18, 1
        %s172 = smul.addr %s171, 4
        %s173 = scalar_lea.vmem %s0, %s172
        %p174 = pneg %p39
        %p175 = pneg %p36
        %p176 = pneg %p60
        %p177 = pneg %p57
        %p178 = pneg %p81
        %p179 = pneg %p78
        %p180 = pneg %p102
        %p181 = pneg %p99
        %p182 = pneg %p128
        %p183 = pneg %p125
        %s184 = sand.u32 %s115, 1
        %s185 = scalar_lea.sflag [#allocation3], %s184
        %s186 = sand.u32 %s115, 1
        %s187 = smul.addr %s186, 8
        %s188 = scalar_lea.vmem [#allocation2], %s187
        %p189 = scmp.lt.s32.totalorder %s18, 1
        %s190 = scalar_select %p189, %s18, 1
        %s191 = smul.addr %s190, 4
        %s192 = scalar_lea.vmem %s0, %s191
        %v194 = vld [vmem:[%s192] sm:$0xf]
        %v196 = vunpack.c.l.b16 %v194
        %v197 = vpack.c.b16 %v196, %v196
        %198 = vrot.lane.b32.xlu0 %v197, 126
        %v199 = vpop.permute.xlu0 %198
        %200 = vrot.lane.b32.xlu0 %v197, 124
        %v201 = vpop.permute.xlu0 %200
        %vm202 = vcmask 1043456
        %v205 = vsel %vm202, %v194, %v199
        %v207 = vld [vmem:[%s1] sm:$0xf]
        %vm208 = vcmask 195584
        %v210 = vsel %vm208, %v207, 0
        %v213 = vsel %vm202, %v201, 0
        %215 = vmatprep.subr.bf16.mxu0 0
        %216 = vmatpush1.bf16.msra.mxu0 0
        %217 = vmatprep.subr.bf16.mxu0 0
        %218 = vmatpush1.bf16.msra.mxu0 0
        %219 = vmatprep.subr.bf16.mxu0 0
        %220 = vmatpush1.bf16.msra.mxu0 0
        %221 = vmatprep.subr.bf16.mxu0 0
        %222 = vmatpush1.bf16.msra.mxu0 0
        %223 = vmatprep.subr.bf16.mxu0 0
        %224 = vmatpush1.bf16.msra.mxu0 0
        %225 = vmatprep.subr.bf16.mxu0 0
        %226 = vmatpush1.bf16.msra.mxu0 0
        %227 = vmatprep.subr.bf16.mxu0 0
        %228 = vmatpush1.bf16.msra.mxu0 %v213
        %229 = vmatprep.subr.bf16.mxu0 0
        %230 = vmatpush1.bf16.msra.mxu0 %v205
        %231 = vmatprep.subr.bf16.mxu0 0
        %232 = vmatpush2.bf16.msra.mxu0 0
        %233 = vmatprep.subr.bf16.mxu0 0
        %234 = vmatpush2.bf16.msra.mxu0 0
        %235 = vmatprep.subr.bf16.mxu0 0
        %236 = vmatpush2.bf16.msra.mxu0 0
        %237 = vmatprep.subr.bf16.mxu0 0
        %238 = vmatpush2.bf16.msra.mxu0 0
        %239 = vmatprep.subr.bf16.mxu0 0
        %240 = vmatpush2.bf16.msra.mxu0 0
        %241 = vmatprep.subr.bf16.mxu0 0
        %242 = vmatpush2.bf16.msra.mxu0 0
        %243 = vmatprep.subr.bf16.mxu0 0
        %244 = vmatpush2.bf16.msra.mxu0 0
        %245 = vmatprep.subr.bf16.mxu0 0
        %246 = vmatpush2.bf16.msra.mxu0 0
        %247 = vmatprep.mubr.bf16.mxu0 0
        %248 = vmatmul.mubr.bf16.gmra.mxu0 %v210
        %v249 = vpop.f32.mrf.mxu0
        %v250 = vadd.f32 0.0, %v249
        %v251 = vpop.f32.mrf.mxu0
        %v252 = vpop.f32.mrf.mxu0
        %v253 = vpop.f32.mrf.mxu0
        %254 = vdwg.mxu0
        %v255 = vld [vmem:[%s2] sm:$0xff]
        %257 = vset.pattern.permute.xlu0 0
        %258 = vperm.xlu0 %257, %v255
        %v259 = vpop.permute.xlu0 %258
        %v261 = vmul.f32 %v250, %v259
        %v262 = vld [vmem:[%s3] sm:$0xff]
        %264 = vset.pattern.permute.xlu0 0
        %265 = vperm.xlu0 %264, %v262
        %v266 = vpop.permute.xlu0 %265
        %v268 = vadd.f32 %v261, %v266
        %v269 = vmax.f32 %v268, 0.0
        %v270 = vunpack.c.l.bf16 %v194
        %272 = vrot.lane.b32.xlu0 %v270, 126
        %v273 = vpop.permute.xlu0 %272
        %v275 = vadd.f32 %v269, %v273
        %vm276 = vcmask 130048
        %277 = vst.msk [vmem:[%s188] sm:$0xff] %vm276, %v275
        %s278 = sand.u32 %s115, 1
        %s279 = scalar_lea.sflag [#allocation3], %s278
        %s280 = sand.u32 %s115, 1
        %s281 = smul.addr %s280, 8
        %s282 = scalar_lea.vmem [#allocation2], %s281
        // Predicated region
        $region37: #{tpu_custom_call.1} parent=35 // pred_check
          %p283 = pneg %p125
        $region38: #{tpu_custom_call.1} parent=35 // pred_check_branch
          %285 = sbr.rel (%p283) target = $region40
        $region39: #{tpu_custom_call.1} parent=35 // pred_region
          %s287 = ssub.s32 128, 128
          %288 = vsyncadd %s279, %s287
          %s289 = smul.addr %s18, 128
          %s290 = scalar_lea.hbm %s4, %s289
          %s292 = sshll.u32 %s282, 4
          %s293 = int_to_ptr.vmem [resolvable:$true] %s292
          %295 = dma.vmem_to_hbm [thread:$0]  %s293, 128, %s290, %s279
        $region40: #{tpu_custom_call.1} parent=35 // pred_fallthru
          _
      $region36: #{tpu_custom_call.1} parent=5 // pred_fallthru
        _
      %p296 = scmp.le.s32.totalorder 2, %s13
      // Predicated region
      $region41: #{tpu_custom_call.1} parent=5 // pred_check
        %p297 = pneg %p296
      $region42: #{tpu_custom_call.1} parent=5 // pred_check_branch
        %299 = sbr.rel (%p297) target = $region44
      $region43: #{tpu_custom_call.1} parent=5 // pred_region
        %s300 = ssub.s32 %s13, 2
        // Predicated region
        $region45: #{tpu_custom_call.1} parent=43 // pred_check
          %p301 = pneg %p131
        $region46: #{tpu_custom_call.1} parent=43 // pred_check_branch
          %303 = sbr.rel (%p301) target = $region48
        $region47: #{tpu_custom_call.1} parent=43 // pred_region
          %s304 = sand.u32 %s116, 1
          %s305 = scalar_lea.sflag [#allocation3], %s304
          %s306 = sand.u32 %s116, 1
          %s307 = smul.addr %s306, 8
          %s308 = scalar_lea.vmem [#allocation2], %s307
          %309 = dma.done %s305, 128
        $region48: #{tpu_custom_call.1} parent=43 // pred_fallthru
          _
      $region44: #{tpu_custom_call.1} parent=5 // pred_fallthru
        _
    $region6: #{tpu_custom_call.1} parent=1 // loop_footer
      %s17 = sadd.s32 1, %s13
    $region7: #{tpu_custom_call.1} parent=1 // loop_footer_branch
      %12 = sbr.rel target = $region3
    $region8: #{tpu_custom_call.1} parent=1 // loop_exit
      _
    %310 = vsyncpa [#allocation3], 1
    %s311 = scalar_lea.sflag [#allocation3], 1
    %312 = vsyncpa %s311, 1

// kernel: tpu_custom_call.1
$region0: #{tpu_custom_call.1}
  #allocation0 [shape = 'u32[]', space=smem, size = 0x4, offset = 0x4, fixed_abs, tag = 'smem constant byte address 0x4 - core index']
  #allocation1 [shape = 'u32[144,128]{1,0:T(1,128)}', space=vmem, size = 0x12000, scoped, tag = 'internal scratch']
  %s0 = inlined_call_operand.vmem [shape: bf16[2,8,20], index: 0, kind: input, shape index: {}]
  %s1 = inlined_call_operand.vmem [shape: bf16[8,24], index: 1, kind: input, shape index: {}]
  %s2 = inlined_call_operand.vmem [shape: f32[8,1], index: 2, kind: input, shape index: {}]
  %s3 = inlined_call_operand.vmem [shape: f32[8,1], index: 3, kind: input, shape index: {}]
  %s4 = inlined_call_operand.hbm [shape: f32[2,8,16], index: 4, kind: output, shape index: {}]
  %s5 = sld [smem:[#allocation0]]
  $region49: #{tpu_custom_call.1} parent=0
    _
  %s7 = ssub.s32 1, %s5
  %s8 = scalar_select 0, %s7, %s5
  $region1: #{tpu_custom_call.1} parent=0
    #allocation2 [shape = 'u8[8192]{0}', space=vmem, size = 0x2000, scoped, tag = 'output window, operand 0']
    #allocation3 [shape = 's32[2]{0}', space=sflag, size = 0x8, scoped, tag = 'scoped memory for tpu_custom_call.1']
    %9 = vsyncpa [#allocation3], 0
    %s10 = scalar_lea.sflag [#allocation3], 1
    %11 = vsyncpa %s10, 0
    loop: start=0, step=1, limit=4
    $region2: #{tpu_custom_call.1} parent=1 // loop_pre_header
      _
    $region3: #{tpu_custom_call.1} parent=1 // loop_header
      %s13 = sphi 0, %s17
      %p14 = scmp.ge.s32.totalorder %s13, 4
      %s23 = sphi 0, %s25
      %s26 = sphi 0, %s23
      %s27 = sphi 0, %s26
      %s43 = sphi 0, %s27
      %s47 = sphi 0, %s47
      %s49 = sphi 0, %s47
      %s50 = sphi 0, %s49
      %s64 = sphi 0, %s50
      %s68 = sphi 0, %s68
      %s70 = sphi 0, %s68
      %s71 = sphi 0, %s70
      %s85 = sphi 0, %s71
      %s89 = sphi 0, %s89
      %s91 = sphi 0, %s89
      %s92 = sphi 0, %s91
      %s106 = sphi 0, %s92
      %s112 = sphi 0, %s114
      %s115 = sphi 0, %s112
      %s116 = sphi 0, %s115
      %s132 = sphi 0, %s116
    $region4: #{tpu_custom_call.1} parent=1 // loop_header_branch
      %16 = sbr.rel (%p14) target = $region8
    $region5: #{tpu_custom_call.1} parent=1 // loop_body
      %s18 = ssub.s32 %s13, 1
      %s19 = ssub.s32 %s13, 2
      %s20 = sadd.s32 %s13, 1
      %s21 = ssub.s32 %s13, %s20
      %p22 = scmp.eq.s32.totalorder %s21, 0
      %s24 = sadd.s32 %s23, 1
      %s25 = scalar_select %p22, %s23, %s24
      %p28 = pneg %p22
      %p29 = scmp.eq.s32.totalorder %s13, 1
      %p30 = por %p28, %p29
      %p31 = scmp.ne.s32.totalorder %s23, %s26
      %p32 = scmp.eq.s32.totalorder %s13, 0
      %p33 = por %p31, %p32
      %p34 = scmp.ne.s32.totalorder %s23, %s26
      %p35 = scmp.eq.s32.totalorder %s18, 1
      %p36 = por %p34, %p35
      %p37 = scmp.ne.s32.totalorder %s26, %s27
      %p38 = scmp.eq.s32.totalorder %s18, 0
      %p39 = por %p37, %p38
      %p40 = scmp.ne.s32.totalorder %s26, %s27
      %p41 = scmp.eq.s32.totalorder %s19, 1
      %p42 = por %p40, %p41
      %p44 = scmp.ne.s32.totalorder %s27, %s43
      %p45 = scmp.eq.s32.totalorder %s19, 0
      %p46 = por %p44, %p45
      %s48 = sadd.s32 %s47, 1
      %p51 = scmp.eq.s32.totalorder %s13, 1
      %p52 = scmp.ne.s32.totalorder %s47, %s49
      %p53 = scmp.eq.s32.totalorder %s13, 0
      %p54 = por %p52, %p53
      %p55 = scmp.ne.s32.totalorder %s47, %s49
      %p56 = scmp.eq.s32.totalorder %s18, 1
      %p57 = por %p55, %p56
      %p58 = scmp.ne.s32.totalorder %s49, %s50
      %p59 = scmp.eq.s32.totalorder %s18, 0
      %p60 = por %p58, %p59
      %p61 = scmp.ne.s32.totalorder %s49, %s50
      %p62 = scmp.eq.s32.totalorder %s19, 1
      %p63 = por %p61, %p62
      %p65 = scmp.ne.s32.totalorder %s50, %s64
      %p66 = scmp.eq.s32.totalorder %s19, 0
      %p67 = por %p65, %p66
      %s69 = sadd.s32 %s68, 1
      %p72 = scmp.eq.s32.totalorder %s13, 1
      %p73 = scmp.ne.s32.totalorder %s68, %s70
      %p74 = scmp.eq.s32.totalorder %s13, 0
      %p75 = por %p73, %p74
      %p76 = scmp.ne.s32.totalorder %s68, %s70
      %p77 = scmp.eq.s32.totalorder %s18, 1
      %p78 = por %p76, %p77
      %p79 = scmp.ne.s32.totalorder %s70, %s71
      %p80 = scmp.eq.s32.totalorder %s18, 0
      %p81 = por %p79, %p80
      %p82 = scmp.ne.s32.totalorder %s70, %s71
      %p83 = scmp.eq.s32.totalorder %s19, 1
      %p84 = por %p82, %p83
      %p86 = scmp.ne.s32.totalorder %s71, %s85
      %p87 = scmp.eq.s32.totalorder %s19, 0
      %p88 = por %p86, %p87
      %s90 = sadd.s32 %s89, 1
      %p93 = scmp.eq.s32.totalorder %s13, 1
      %p94 = scmp.ne.s32.totalorder %s89, %s91
      %p95 = scmp.eq.s32.totalorder %s13, 0
      %p96 = por %p94, %p95
      %p97 = scmp.ne.s32.totalorder %s89, %s91
      %p98 = scmp.eq.s32.totalorder %s18, 1
      %p99 = por %p97, %p98
      %p100 = scmp.ne.s32.totalorder %s91, %s92
      %p101 = scmp.eq.s32.totalorder %s18, 0
      %p102 = por %p100, %p101
      %p103 = scmp.ne.s32.totalorder %s91, %s92
      %p104 = scmp.eq.s32.totalorder %s19, 1
      %p105 = por %p103, %p104
      %p107 = scmp.ne.s32.totalorder %s92, %s106
      %p108 = scmp.eq.s32.totalorder %s19, 0
      %p109 = por %p107, %p108
      %s110 = ssub.s32 %s13, %s20
      %p111 = scmp.eq.s32.totalorder %s110, 0
      %s113 = sadd.s32 %s112, 1
      %s114 = scalar_select %p111, %s112, %s113
      %p117 = pneg %p111
      %p118 = scmp.eq.s32.totalorder %s13, 1
      %p119 = por %p117, %p118
      %p120 = scmp.ne.s32.totalorder %s112, %s115
      %p121 = scmp.eq.s32.totalorder %s13, 0
      %p122 = por %p120, %p121
      %p123 = scmp.ne.s32.totalorder %s112, %s115
      %p124 = scmp.eq.s32.totalorder %s18, 1
      %p125 = por %p123, %p124
      %p126 = scmp.ne.s32.totalorder %s115, %s116
      %p127 = scmp.eq.s32.totalorder %s18, 0
      %p128 = por %p126, %p127
      %p129 = scmp.ne.s32.totalorder %s115, %s116
      %p130 = scmp.eq.s32.totalorder %s19, 1
      %p131 = por %p129, %p130
      %p133 = scmp.ne.s32.totalorder %s116, %s132
      %p134 = scmp.eq.s32.totalorder %s19, 0
      %p135 = por %p133, %p134
      %p136 = scmp.le.s32.totalorder 1, %s13
      %p137 = scmp.lt.s32.totalorder %s13, 3
      %p138 = pnand %p136, %p137
      %p139 = pneg %p138
      // Predicated region
      $region9: #{tpu_custom_call.1} parent=5 // pred_check
        _
      $region10: #{tpu_custom_call.1} parent=5 // pred_check_branch
        %141 = sbr.rel (%p138) target = $region12
      $region11: #{tpu_custom_call.1} parent=5 // pred_region
        %s142 = ssub.s32 %s13, 1
        // Predicated region
        $region13: #{tpu_custom_call.1} parent=11 // pred_check
          %p143 = pneg %p60
        $region14: #{tpu_custom_call.1} parent=11 // pred_check_branch
          %145 = sbr.rel (%p143) target = $region16
        $region15: #{tpu_custom_call.1} parent=11 // pred_region
          _
        $region16: #{tpu_custom_call.1} parent=11 // pred_fallthru
          _
        // Predicated region
        $region17: #{tpu_custom_call.1} parent=11 // pred_check
          %p146 = pneg %p81
        $region18: #{tpu_custom_call.1} parent=11 // pred_check_branch
          %148 = sbr.rel (%p146) target = $region20
        $region19: #{tpu_custom_call.1} parent=11 // pred_region
          _
        $region20: #{tpu_custom_call.1} parent=11 // pred_fallthru
          _
        // Predicated region
        $region21: #{tpu_custom_call.1} parent=11 // pred_check
          %p149 = pneg %p102
        $region22: #{tpu_custom_call.1} parent=11 // pred_check_branch
          %151 = sbr.rel (%p149) target = $region24
        $region23: #{tpu_custom_call.1} parent=11 // pred_region
          _
        $region24: #{tpu_custom_call.1} parent=11 // pred_fallthru
          _
      $region12: #{tpu_custom_call.1} parent=5 // pred_fallthru
        _
      %p152 = scmp.lt.s32.totalorder %s13, 2
      // Predicated region
      $region25: #{tpu_custom_call.1} parent=5 // pred_check
        %p153 = pneg %p152
      $region26: #{tpu_custom_call.1} parent=5 // pred_check_branch
        %155 = sbr.rel (%p153) target = $region28
      $region27: #{tpu_custom_call.1} parent=5 // pred_region
        // Predicated region
        $region29: #{tpu_custom_call.1} parent=27 // pred_check
          %p156 = pneg %p33
        $region30: #{tpu_custom_call.1} parent=27 // pred_check_branch
          %158 = sbr.rel (%p156) target = $region32
        $region31: #{tpu_custom_call.1} parent=27 // pred_region
          %p159 = scmp.lt.s32.totalorder %s13, 1
          %s160 = scalar_select %p159, %s13, 1
          %s161 = smul.addr %s160, 4
          %s162 = scalar_lea.vmem %s0, %s161
        $region32: #{tpu_custom_call.1} parent=27 // pred_fallthru
          _
      $region28: #{tpu_custom_call.1} parent=5 // pred_fallthru
        _
      %p163 = scmp.le.s32.totalorder 1, %s13
      %p164 = scmp.lt.s32.totalorder %s13, 3
      %p165 = pnand %p163, %p164
      %p166 = pneg %p165
      // Predicated region
      $region33: #{tpu_custom_call.1} parent=5 // pred_check
        _
      $region34: #{tpu_custom_call.1} parent=5 // pred_check_branch
        %168 = sbr.rel (%p165) target = $region36
      $region35: #{tpu_custom_call.1} parent=5 // pred_region
        %s169 = ssub.s32 %s13, 1
        %p170 = scmp.lt.s32.totalorder %s18, 1
        %s171 = scalar_select %p170, %s18, 1
        %s172 = smul.addr %s171, 4
        %s173 = scalar_lea.vmem %s0, %s172
        %p174 = pneg %p39
        %p175 = pneg %p36
        %p176 = pneg %p60
        %p177 = pneg %p57
        %p178 = pneg %p81
        %p179 = pneg %p78
        %p180 = pneg %p102
        %p181 = pneg %p99
        %p182 = pneg %p128
        %p183 = pneg %p125
        %s184 = sand.u32 %s115, 1
        %s185 = scalar_lea.sflag [#allocation3], %s184
        %s186 = sand.u32 %s115, 1
        %s187 = smul.addr %s186, 8
        %s188 = scalar_lea.vmem [#allocation2], %s187
        %p189 = scmp.lt.s32.totalorder %s18, 1
        %s190 = scalar_select %p189, %s18, 1
        %s191 = smul.addr %s190, 4
        %s192 = scalar_lea.vmem %s0, %s191
        %v194 = vld [vmem:[%s192] sm:$0xf]
        %v196 = vunpack.c.l.b16 %v194
        %v197 = vpack.c.b16 %v196, %v196
        %198 = vrot.lane.b32.xlu0 %v197, 126
        %v199 = vpop.permute.xlu0 %198
        %200 = vrot.lane.b32.xlu0 %v197, 124
        %v201 = vpop.permute.xlu0 %200
        %vm202 = vcmask 1043456
        %v205 = vsel %vm202, %v194, %v199
        %v207 = vld [vmem:[%s1] sm:$0xf]
        %vm208 = vcmask 195584
        %v210 = vsel %vm208, %v207, 0
        %v213 = vsel %vm202, %v201, 0
        %215 = vmatprep.subr.bf16.mxu0 0
        %216 = vmatpush1.bf16.msra.mxu0 0
        %217 = vmatprep.subr.bf16.mxu0 0
        %218 = vmatpush1.bf16.msra.mxu0 0
        %219 = vmatprep.subr.bf16.mxu0 0
        %220 = vmatpush1.bf16.msra.mxu0 0
        %221 = vmatprep.subr.bf16.mxu0 0
        %222 = vmatpush1.bf16.msra.mxu0 0
        %223 = vmatprep.subr.bf16.mxu0 0
        %224 = vmatpush1.bf16.msra.mxu0 0
        %225 = vmatprep.subr.bf16.mxu0 0
        %226 = vmatpush1.bf16.msra.mxu0 0
        %227 = vmatprep.subr.bf16.mxu0 0
        %228 = vmatpush1.bf16.msra.mxu0 %v213
        %229 = vmatprep.subr.bf16.mxu0 0
        %230 = vmatpush1.bf16.msra.mxu0 %v205
        %231 = vmatprep.subr.bf16.mxu0 0
        %232 = vmatpush2.bf16.msra.mxu0 0
        %233 = vmatprep.subr.bf16.mxu0 0
        %234 = vmatpush2.bf16.msra.mxu0 0
        %235 = vmatprep.subr.bf16.mxu0 0
        %236 = vmatpush2.bf16.msra.mxu0 0
        %237 = vmatprep.subr.bf16.mxu0 0
        %238 = vmatpush2.bf16.msra.mxu0 0
        %239 = vmatprep.subr.bf16.mxu0 0
        %240 = vmatpush2.bf16.msra.mxu0 0
        %241 = vmatprep.subr.bf16.mxu0 0
        %242 = vmatpush2.bf16.msra.mxu0 0
        %243 = vmatprep.subr.bf16.mxu0 0
        %244 = vmatpush2.bf16.msra.mxu0 0
        %245 = vmatprep.subr.bf16.mxu0 0
        %246 = vmatpush2.bf16.msra.mxu0 0
        %247 = vmatprep.mubr.bf16.mxu0 0
        %248 = vmatmul.mubr.bf16.gmra.mxu0 %v210
        %v249 = vpop.f32.mrf.mxu0
        %v250 = vadd.f32 0.0, %v249
        %v251 = vpop.f32.mrf.mxu0
        %v252 = vpop.f32.mrf.mxu0
        %v253 = vpop.f32.mrf.mxu0
        %254 = vdwg.mxu0
        %v255 = vld [vmem:[%s2] sm:$0xff]
        %257 = vset.pattern.permute.xlu0 0
        %258 = vperm.xlu0 %257, %v255
        %v259 = vpop.permute.xlu0 %258
        %v261 = vmul.f32 %v250, %v259
        %v262 = vld [vmem:[%s3] sm:$0xff]
        %264 = vset.pattern.permute.xlu0 0
        %265 = vperm.xlu0 %264, %v262
        %v266 = vpop.permute.xlu0 %265
        %v268 = vadd.f32 %v261, %v266
        %v269 = vmax.f32 %v268, 0.0
        %v270 = vunpack.c.l.bf16 %v194
        %272 = vrot.lane.b32.xlu0 %v270, 126
        %v273 = vpop.permute.xlu0 %272
        %v275 = vadd.f32 %v269, %v273
        %vm276 = vcmask 130048
        %277 = vst.msk [vmem:[%s188] sm:$0xff] %vm276, %v275
        %s278 = sand.u32 %s115, 1
        %s279 = scalar_lea.sflag [#allocation3], %s278
        %s280 = sand.u32 %s115, 1
        %s281 = smul.addr %s280, 8
        %s282 = scalar_lea.vmem [#allocation2], %s281
        // Predicated region
        $region37: #{tpu_custom_call.1} parent=35 // pred_check
          %p283 = pneg %p125
        $region38: #{tpu_custom_call.1} parent=35 // pred_check_branch
          %285 = sbr.rel (%p283) target = $region40
        $region39: #{tpu_custom_call.1} parent=35 // pred_region
          %s287 = ssub.s32 128, 128
          %288 = vsyncadd %s279, %s287
          %s289 = smul.addr %s18, 128
          %s290 = scalar_lea.hbm %s4, %s289
          %s292 = sshll.u32 %s282, 4
          %s293 = int_to_ptr.vmem [resolvable:$true] %s292
          %295 = dma.vmem_to_hbm [thread:$0]  %s293, 128, %s290, %s279
        $region40: #{tpu_custom_call.1} parent=35 // pred_fallthru
          _
      $region36: #{tpu_custom_call.1} parent=5 // pred_fallthru
        _
      %p296 = scmp.le.s32.totalorder 2, %s13
      // Predicated region
      $region41: #{tpu_custom_call.1} parent=5 // pred_check
        %p297 = pneg %p296
      $region42: #{tpu_custom_call.1} parent=5 // pred_check_branch
        %299 = sbr.rel (%p297) target = $region44
      $region43: #{tpu_custom_call.1} parent=5 // pred_region
        %s300 = ssub.s32 %s13, 2
        // Predicated region
        $region45: #{tpu_custom_call.1} parent=43 // pred_check
          %p301 = pneg %p131
        $region46: #{tpu_custom_call.1} parent=43 // pred_check_branch
          %303 = sbr.rel (%p301) target = $region48
        $region47: #{tpu_custom_call.1} parent=43 // pred_region
          %s304 = sand.u32 %s116, 1
          %s305 = scalar_lea.sflag [#allocation3], %s304
          %s306 = sand.u32 %s116, 1
          %s307 = smul.addr %s306, 8
          %s308 = scalar_lea.vmem [#allocation2], %s307
          %309 = dma.done %s305, 128
        $region48: #{tpu_custom_call.1} parent=43 // pred_fallthru
          _
      $region44: #{tpu_custom_call.1} parent=5 // pred_fallthru
        _
    $region6: #{tpu_custom_call.1} parent=1 // loop_footer
      %s17 = sadd.s32 1, %s13
    $region7: #{tpu_custom_call.1} parent=1 // loop_footer_branch
      %12 = sbr.rel target = $region3
    $region8: #{tpu_custom_call.1} parent=1 // loop_exit
      _
    %310 = vsyncpa [#allocation3], 1
    %s311 = scalar_lea.sflag [#allocation3], 1
    %312 = vsyncpa %s311, 1

</llo_original>
